<compile_context>
chip_gen: v6e
topology: v6e:2x2x1
jax: 0.10.0
libtpu: 0.0.40
codegen_flags: <defaults>
</compile_context>

<pallas_src>
import math

import jax
import jax.numpy as jnp
from jax import lax
from jax.experimental import pallas as pl
from jax.experimental.pallas import tpu as pltpu

NUM_FEATURES = 549
NUM_CLASSES = 7
HIDDEN = (256, 128, 64)

_LANE = 128


def _round_up(x, m):
    return (x + m - 1) // m * m


def _gelu_exact(x):
    # PyTorch F.gelu default: exact erf-based GELU (computed in f32).
    return 0.5 * x * (1.0 + lax.erf(x * (1.0 / math.sqrt(2.0))))


def _mlp_kernel(x_ref, w1_ref, b1_ref, w2_ref, b2_ref, w3_ref, b3_ref,
                w4_ref, b4_ref, o_ref):
    # Operands (x / W / activations) in compute dtype (bf16 by default), MXU
    # accumulation and bias/GELU math in f32.
    cdt = w1_ref.dtype
    h = jnp.dot(x_ref[...], w1_ref[...], preferred_element_type=jnp.float32) + b1_ref[...]
    h = _gelu_exact(h).astype(cdt)
    h = jnp.dot(h, w2_ref[...], preferred_element_type=jnp.float32) + b2_ref[...]
    h = _gelu_exact(h).astype(cdt)
    h = jnp.dot(h, w3_ref[...], preferred_element_type=jnp.float32) + b3_ref[...]
    h = _gelu_exact(h).astype(cdt)
    out = jnp.dot(h, w4_ref[...], preferred_element_type=jnp.float32) + b4_ref[...]
    o_ref[...] = out.astype(o_ref.dtype)


def diagnosis_classifier_forward(x, params, *, batch_tile=1024,
                                 compute_dtype=jnp.bfloat16):
    """Fused 4-layer MLP forward, batch-tiled, weights resident per tile.

    - Arbitrary batch sizes supported via a cdiv grid (partial last block is
      masked by Pallas; rows are independent).
    - compute_dtype=jnp.bfloat16 (default) casts MXU operands to bf16 with f32
      accumulation; use jnp.float32 for exact-f32 PyTorch parity.
    """
    (w1, b1), (w2, b2), (w3, b3), (w4, b4) = params
    B, F = x.shape
    assert F == w1.shape[0]
    n_classes = w4.shape[1]

    # Sublane alignment for the batch-tile: 16 for bf16 (packed sublanes), 8 f32.
    sub = 16 if compute_dtype == jnp.bfloat16 else 8
    batch_tile = _round_up(batch_tile, sub)

    # Guarantee >=2 grid steps when the batch allows it (keeps both v7x
    # TensorCores busy via dimension_semantics=("parallel",)), capped at
    # batch_tile for large batches.
    tile = max(sub, min(batch_tile, _round_up(pl.cdiv(B, 2), sub)))
    grid = (pl.cdiv(B, tile),)

    # Lane-dense output: pad the class dim up to 128 so stores are unmasked;
    # padding w4/b4 is tiny wrapper-side layout plumbing.
    nc_pad = _round_up(n_classes, _LANE)
    if nc_pad != n_classes:
        w4p = jnp.pad(w4, ((0, 0), (0, nc_pad - n_classes)))
        b4p = jnp.pad(b4, ((0, 0), (0, nc_pad - n_classes)))
    else:
        w4p, b4p = w4, b4

    # bf16 (or f32) MXU operands; biases stay f32 for the f32 epilogue math.
    xc = x.astype(compute_dtype)
    w1c, w2c, w3c, w4c = (w.astype(compute_dtype) for w in (w1, w2, w3, w4p))
    b1c, b2c, b3c, b4c = (b.astype(jnp.float32) for b in (b1, b2, b3, b4p))

    full = lambda a: pl.BlockSpec(a.shape, lambda i: (0,) * a.ndim)

    op_bytes = jnp.dtype(compute_dtype).itemsize
    weight_elems = F * 256 + 256 * 128 + 128 * 64 + 64 * nc_pad
    cost = pl.CostEstimate(
        flops=2 * B * weight_elems,
        transcendentals=B * (256 + 128 + 64),  # erf per hidden activation
        bytes_accessed=(B * F * op_bytes            # x read
                        + weight_elems * op_bytes   # weights read
                        + (256 + 128 + 64 + nc_pad) * 4  # biases
                        + B * nc_pad * 4),          # f32 output write
    )

    out = pl.pallas_call(
        _mlp_kernel,
        out_shape=jax.ShapeDtypeStruct((B, nc_pad), jnp.float32),
        grid_spec=pltpu.PrefetchScalarGridSpec(
            num_scalar_prefetch=0,
            grid=grid,
            in_specs=[
                pl.BlockSpec((tile, F), lambda i: (i, 0)),
                full(w1c), full(b1c),
                full(w2c), full(b2c),
                full(w3c), full(b3c),
                full(w4c), full(b4c),
            ],
            out_specs=pl.BlockSpec((tile, nc_pad), lambda i: (i, 0)),
        ),
        compiler_params=pltpu.CompilerParams(
            dimension_semantics=("parallel",),
            vmem_limit_bytes=48 * 1024 * 1024,
        ),
        cost_estimate=cost,
    )(xc, w1c, b1c, w2c, b2c, w3c, b3c, w4c, b4c)

    return out[:, :n_classes]


def init_params(key, num_features=NUM_FEATURES, num_classes=NUM_CLASSES):
    """Deterministic init mimicking nn.Linear's default uniform init.

    Weights are returned transposed: shape (in_features, out_features).
    Biases are returned with shape (1, out_features) for clean broadcasting.
    """
    dims = [num_features, *HIDDEN, num_classes]
    params = []
    for fan_in, fan_out in zip(dims[:-1], dims[1:]):
        key, kw, kb = jax.random.split(key, 3)
        bound = 1.0 / math.sqrt(fan_in)
        w = jax.random.uniform(kw, (fan_in, fan_out), jnp.float32, -bound, bound)
        b = jax.random.uniform(kb, (1, fan_out), jnp.float32, -bound, bound)
        params.append((w, b))
    return params


def _reference_forward(x, params, compute_dtype=jnp.bfloat16):
    """Pure-JAX reference using the same dtype path as the kernel."""
    h = x.astype(compute_dtype)
    for i, (w, b) in enumerate(params):
        h = jnp.dot(h, w.astype(compute_dtype),
                    preferred_element_type=jnp.float32) + b.astype(jnp.float32)
        if i < len(params) - 1:
            h = _gelu_exact(h).astype(compute_dtype)
    return h


if __name__ == "__main__":
    key = jax.random.PRNGKey(0)
    key, kx = jax.random.split(key)

    # Small, deliberately ragged batch (exercises the partial-last-block path).
    batch = 10
    x = jax.random.normal(kx, (batch, NUM_FEATURES), jnp.float32)
    params = init_params(key)

    out = diagnosis_classifier_forward(x, params)  # bf16 operands, f32 accum
    out = jax.block_until_ready(out)

    ref = _reference_forward(x, params)
    assert out.shape == (batch, NUM_CLASSES)
    assert jnp.allclose(out, ref, atol=2e-2, rtol=2e-2), "mismatch vs reference"

    print("KERNEL_OK")
</pallas_src>

<mosaic_0001>
module attributes {stable_mosaic.version = 11 : i64} {
  func.func @_mlp_kernel(%arg0: i32, %arg1: memref<16x549xbf16, #tpu.memory_space<vmem>>, %arg2: memref<549x256xbf16, #tpu.memory_space<vmem>>, %arg3: memref<1x256xf32, #tpu.memory_space<vmem>>, %arg4: memref<256x128xbf16, #tpu.memory_space<vmem>>, %arg5: memref<1x128xf32, #tpu.memory_space<vmem>>, %arg6: memref<128x64xbf16, #tpu.memory_space<vmem>>, %arg7: memref<1x64xf32, #tpu.memory_space<vmem>>, %arg8: memref<64x128xbf16, #tpu.memory_space<vmem>>, %arg9: memref<1x128xf32, #tpu.memory_space<vmem>>, %arg10: memref<16x128xf32, #tpu.memory_space<vmem>>) attributes {dimension_semantics = [#tpu.dimension_semantics<parallel>], iteration_bounds = array<i64: 1>, scalar_prefetch = 0 : i64, scratch_operands = 0 : i64, tpu.core_type = #tpu.core_type<tc>, window_params = [{transform_indices = @transform_0, window_bounds = array<i64: 16, 549>}, {pipeline_mode = #tpu.pipeline_mode<synchronous>, transform_indices = @transform_1, window_bounds = array<i64: 549, 256>}, {pipeline_mode = #tpu.pipeline_mode<synchronous>, transform_indices = @transform_2, window_bounds = array<i64: 1, 256>}, {pipeline_mode = #tpu.pipeline_mode<synchronous>, transform_indices = @transform_3, window_bounds = array<i64: 256, 128>}, {pipeline_mode = #tpu.pipeline_mode<synchronous>, transform_indices = @transform_4, window_bounds = array<i64: 1, 128>}, {pipeline_mode = #tpu.pipeline_mode<synchronous>, transform_indices = @transform_5, window_bounds = array<i64: 128, 64>}, {pipeline_mode = #tpu.pipeline_mode<synchronous>, transform_indices = @transform_6, window_bounds = array<i64: 1, 64>}, {pipeline_mode = #tpu.pipeline_mode<synchronous>, transform_indices = @transform_7, window_bounds = array<i64: 64, 128>}, {pipeline_mode = #tpu.pipeline_mode<synchronous>, transform_indices = @transform_8, window_bounds = array<i64: 1, 128>}, {transform_indices = @transform_9, window_bounds = array<i64: 16, 128>}]} {
    %c0 = arith.constant 0 : index
    %c0_0 = arith.constant 0 : index
    %0 = vector.load %arg1[%c0, %c0_0] : memref<16x549xbf16, #tpu.memory_space<vmem>>, vector<16x549xbf16>
    %c0_1 = arith.constant 0 : index
    %c0_2 = arith.constant 0 : index
    %1 = vector.load %arg2[%c0_1, %c0_2] : memref<549x256xbf16, #tpu.memory_space<vmem>>, vector<549x256xbf16>
    %cst = arith.constant dense<0.000000e+00> : vector<16x256xf32>
    %2 = tpu.matmul %0, %1, %cst {dimension_numbers = #tpu.dot_dimension_numbers<[1], [0], [0], [1], [0, 0, 1, 1], [], []>} : vector<16x549xbf16>, vector<549x256xbf16>, vector<16x256xf32> -> vector<16x256xf32>
    %c0_3 = arith.constant 0 : index
    %c0_4 = arith.constant 0 : index
    %3 = vector.load %arg3[%c0_3, %c0_4] : memref<1x256xf32, #tpu.memory_space<vmem>>, vector<1x256xf32>
    %4 = vector.broadcast %3 : vector<1x256xf32> to vector<16x256xf32>
    %5 = arith.addf %2, %4 : vector<16x256xf32>
    %cst_5 = arith.constant 5.000000e-01 : f32
    %6 = vector.broadcast %cst_5 : f32 to vector<16x256xf32>
    %7 = arith.mulf %6, %5 : vector<16x256xf32>
    %cst_6 = arith.constant 0.707106769 : f32
    %8 = vector.broadcast %cst_6 : f32 to vector<16x256xf32>
    %9 = arith.mulf %5, %8 : vector<16x256xf32>
    %10 = math.erf %9 : vector<16x256xf32>
    %cst_7 = arith.constant 1.000000e+00 : f32
    %11 = vector.broadcast %cst_7 : f32 to vector<16x256xf32>
    %12 = arith.addf %11, %10 : vector<16x256xf32>
    %13 = arith.mulf %7, %12 : vector<16x256xf32>
    %14 = arith.truncf %13 : vector<16x256xf32> to vector<16x256xbf16>
    %c0_8 = arith.constant 0 : index
    %c0_9 = arith.constant 0 : index
    %15 = vector.load %arg4[%c0_8, %c0_9] : memref<256x128xbf16, #tpu.memory_space<vmem>>, vector<256x128xbf16>
    %cst_10 = arith.constant dense<0.000000e+00> : vector<16x128xf32>
    %16 = tpu.matmul %14, %15, %cst_10 {dimension_numbers = #tpu.dot_dimension_numbers<[1], [0], [0], [1], [0, 0, 1, 1], [], []>} : vector<16x256xbf16>, vector<256x128xbf16>, vector<16x128xf32> -> vector<16x128xf32>
    %c0_11 = arith.constant 0 : index
    %c0_12 = arith.constant 0 : index
    %17 = vector.load %arg5[%c0_11, %c0_12] : memref<1x128xf32, #tpu.memory_space<vmem>>, vector<1x128xf32>
    %18 = vector.broadcast %17 : vector<1x128xf32> to vector<16x128xf32>
    %19 = arith.addf %16, %18 : vector<16x128xf32>
    %cst_13 = arith.constant 5.000000e-01 : f32
    %20 = vector.broadcast %cst_13 : f32 to vector<16x128xf32>
    %21 = arith.mulf %20, %19 : vector<16x128xf32>
    %cst_14 = arith.constant 0.707106769 : f32
    %22 = vector.broadcast %cst_14 : f32 to vector<16x128xf32>
    %23 = arith.mulf %19, %22 : vector<16x128xf32>
    %24 = math.erf %23 : vector<16x128xf32>
    %cst_15 = arith.constant 1.000000e+00 : f32
    %25 = vector.broadcast %cst_15 : f32 to vector<16x128xf32>
    %26 = arith.addf %25, %24 : vector<16x128xf32>
    %27 = arith.mulf %21, %26 : vector<16x128xf32>
    %28 = arith.truncf %27 : vector<16x128xf32> to vector<16x128xbf16>
    %c0_16 = arith.constant 0 : index
    %c0_17 = arith.constant 0 : index
    %29 = vector.load %arg6[%c0_16, %c0_17] : memref<128x64xbf16, #tpu.memory_space<vmem>>, vector<128x64xbf16>
    %cst_18 = arith.constant dense<0.000000e+00> : vector<16x64xf32>
    %30 = tpu.matmul %28, %29, %cst_18 {dimension_numbers = #tpu.dot_dimension_numbers<[1], [0], [0], [1], [0, 0, 1, 1], [], []>} : vector<16x128xbf16>, vector<128x64xbf16>, vector<16x64xf32> -> vector<16x64xf32>
    %c0_19 = arith.constant 0 : index
    %c0_20 = arith.constant 0 : index
    %31 = vector.load %arg7[%c0_19, %c0_20] : memref<1x64xf32, #tpu.memory_space<vmem>>, vector<1x64xf32>
    %32 = vector.broadcast %31 : vector<1x64xf32> to vector<16x64xf32>
    %33 = arith.addf %30, %32 : vector<16x64xf32>
    %cst_21 = arith.constant 5.000000e-01 : f32
    %34 = vector.broadcast %cst_21 : f32 to vector<16x64xf32>
    %35 = arith.mulf %34, %33 : vector<16x64xf32>
    %cst_22 = arith.constant 0.707106769 : f32
    %36 = vector.broadcast %cst_22 : f32 to vector<16x64xf32>
    %37 = arith.mulf %33, %36 : vector<16x64xf32>
    %38 = math.erf %37 : vector<16x64xf32>
    %cst_23 = arith.constant 1.000000e+00 : f32
    %39 = vector.broadcast %cst_23 : f32 to vector<16x64xf32>
    %40 = arith.addf %39, %38 : vector<16x64xf32>
    %41 = arith.mulf %35, %40 : vector<16x64xf32>
    %42 = arith.truncf %41 : vector<16x64xf32> to vector<16x64xbf16>
    %c0_24 = arith.constant 0 : index
    %c0_25 = arith.constant 0 : index
    %43 = vector.load %arg8[%c0_24, %c0_25] : memref<64x128xbf16, #tpu.memory_space<vmem>>, vector<64x128xbf16>
    %cst_26 = arith.constant dense<0.000000e+00> : vector<16x128xf32>
    %44 = tpu.matmul %42, %43, %cst_26 {dimension_numbers = #tpu.dot_dimension_numbers<[1], [0], [0], [1], [0, 0, 1, 1], [], []>} : vector<16x64xbf16>, vector<64x128xbf16>, vector<16x128xf32> -> vector<16x128xf32>
    %c0_27 = arith.constant 0 : index
    %c0_28 = arith.constant 0 : index
    %45 = vector.load %arg9[%c0_27, %c0_28] : memref<1x128xf32, #tpu.memory_space<vmem>>, vector<1x128xf32>
    %46 = vector.broadcast %45 : vector<1x128xf32> to vector<16x128xf32>
    %47 = arith.addf %44, %46 : vector<16x128xf32>
    %c0_29 = arith.constant 0 : index
    %c0_30 = arith.constant 0 : index
    %48 = vector.load %arg10[%c0_29, %c0_30] : memref<16x128xf32, #tpu.memory_space<vmem>>, vector<16x128xf32>
    tpu.vector_store %arg10[%c0_29, %c0_30], %47 {strides = array<i32>} : memref<16x128xf32, #tpu.memory_space<vmem>>, vector<16x128xf32>,
    return
  }
  func.func @transform_0(%arg0: i32) -> (i32, i32) {
    %c0_i32 = arith.constant 0 : i32
    %c0_i32_0 = arith.constant 0 : i32
    return %arg0, %c0_i32 : i32, i32
  }
  func.func @transform_1(%arg0: i32) -> (i32, i32) {
    %c0_i32 = arith.constant 0 : i32
    %c0_i32_0 = arith.constant 0 : i32
    %c0_i32_1 = arith.constant 0 : i32
    return %c0_i32, %c0_i32_0 : i32, i32
  }
  func.func @transform_2(%arg0: i32) -> (i32, i32) {
    %c0_i32 = arith.constant 0 : i32
    %c0_i32_0 = arith.constant 0 : i32
    %c0_i32_1 = arith.constant 0 : i32
    return %c0_i32, %c0_i32_0 : i32, i32
  }
  func.func @transform_3(%arg0: i32) -> (i32, i32) {
    %c0_i32 = arith.constant 0 : i32
    %c0_i32_0 = arith.constant 0 : i32
    %c0_i32_1 = arith.constant 0 : i32
    return %c0_i32, %c0_i32_0 : i32, i32
  }
  func.func @transform_4(%arg0: i32) -> (i32, i32) {
    %c0_i32 = arith.constant 0 : i32
    %c0_i32_0 = arith.constant 0 : i32
    %c0_i32_1 = arith.constant 0 : i32
    return %c0_i32, %c0_i32_0 : i32, i32
  }
  func.func @transform_5(%arg0: i32) -> (i32, i32) {
    %c0_i32 = arith.constant 0 : i32
    %c0_i32_0 = arith.constant 0 : i32
    %c0_i32_1 = arith.constant 0 : i32
    return %c0_i32, %c0_i32_0 : i32, i32
  }
  func.func @transform_6(%arg0: i32) -> (i32, i32) {
    %c0_i32 = arith.constant 0 : i32
    %c0_i32_0 = arith.constant 0 : i32
    %c0_i32_1 = arith.constant 0 : i32
    return %c0_i32, %c0_i32_0 : i32, i32
  }
  func.func @transform_7(%arg0: i32) -> (i32, i32) {
    %c0_i32 = arith.constant 0 : i32
    %c0_i32_0 = arith.constant 0 : i32
    %c0_i32_1 = arith.constant 0 : i32
    return %c0_i32, %c0_i32_0 : i32, i32
  }
  func.func @transform_8(%arg0: i32) -> (i32, i32) {
    %c0_i32 = arith.constant 0 : i32
    %c0_i32_0 = arith.constant 0 : i32
    %c0_i32_1 = arith.constant 0 : i32
    return %c0_i32, %c0_i32_0 : i32, i32
  }
  func.func @transform_9(%arg0: i32) -> (i32, i32) {
    %c0_i32 = arith.constant 0 : i32
    %c0_i32_0 = arith.constant 0 : i32
    return %arg0, %c0_i32 : i32, i32
  }
}

</mosaic_0001>

<llo_original>
// kernel: tpu_custom_call.1
$region0: #{tpu_custom_call.1}
  #allocation0 [shape = 'u32[]', space=smem, size = 0x4, offset = 0x4, fixed_abs, tag = 'smem constant byte address 0x4 - core index']
  #allocation1 [shape = 'u32[144,128]{1,0:T(1,128)}', space=vmem, size = 0x12000, scoped, tag = 'internal scratch']
  %s0 = inlined_call_operand.vmem [shape: bf16[10,549], index: 0, kind: input, shape index: {}]
  %s1 = inlined_call_operand.hbm [shape: bf16[549,256], index: 1, kind: input, shape index: {}]
  %s2 = inlined_call_operand.vmem [shape: f32[1,256], index: 2, kind: input, shape index: {}]
  %s3 = inlined_call_operand.hbm [shape: bf16[256,128], index: 3, kind: input, shape index: {}]
  %s4 = inlined_call_operand.vmem [shape: f32[1,128], index: 4, kind: input, shape index: {}]
  %s5 = inlined_call_operand.vmem [shape: bf16[128,64], index: 5, kind: input, shape index: {}]
  %s6 = inlined_call_operand.vmem [shape: f32[1,64], index: 6, kind: input, shape index: {}]
  %s7 = inlined_call_operand.vmem [shape: bf16[64,128], index: 7, kind: input, shape index: {}]
  %s8 = inlined_call_operand.vmem [shape: f32[1,128], index: 8, kind: input, shape index: {}]
  %s9 = inlined_call_operand.hbm [shape: f32[10,128], index: 9, kind: output, shape index: {}]
  %s10 = sld [smem:[#allocation0]]
  $region54: #{tpu_custom_call.1} parent=0
    _
  %s12 = ssub.s32 1, %s10
  %s13 = scalar_select 0, %s12, %s10
  $region1: #{tpu_custom_call.1} parent=0
    #allocation2 [shape = 'u8[282624]{0}', space=vmem, size = 0x45000, scoped, tag = 'input window, operand 1, single buffered']
    #allocation3 [shape = 's32[1]{0}', space=sflag, size = 0x4, scoped, tag = 'scoped memory for tpu_custom_call.1']
    #allocation4 [shape = 's32[1]{0}', space=sflag, size = 0x4, scoped, tag = 'scoped memory for tpu_custom_call.1']
    #allocation5 [shape = 'u8[65536]{0}', space=vmem, size = 0x10000, scoped, tag = 'input window, operand 3, single buffered']
    #allocation6 [shape = 's32[1]{0}', space=sflag, size = 0x4, scoped, tag = 'scoped memory for tpu_custom_call.1']
    #allocation7 [shape = 'u8[8192]{0}', space=vmem, size = 0x2000, scoped, tag = 'output window, operand 0, single buffered']
    %14 = vsyncpa [#allocation3], 0
    %15 = vsyncpa [#allocation6], 0
    %16 = vsyncpa [#allocation4], 0
    // Predicated region
    $region2: #{tpu_custom_call.1} parent=1 // pred_check
      _
    $region3: #{tpu_custom_call.1} parent=1 // pred_check_branch
      %18 = sbr.rel (0) target = $region5
    $region4: #{tpu_custom_call.1} parent=1 // pred_region
      _
    $region5: #{tpu_custom_call.1} parent=1 // pred_fallthru
      _
    // Predicated region
    $region6: #{tpu_custom_call.1} parent=1 // pred_check
      _
    $region7: #{tpu_custom_call.1} parent=1 // pred_check_branch
      %20 = sbr.rel (0) target = $region9
    $region8: #{tpu_custom_call.1} parent=1 // pred_region
      %s22 = ssub.s32 8832, 8832
      %23 = vsyncadd [#allocation3], %s22
      %s24 = sshll.u32 [#allocation2], 4
      %s25 = int_to_ptr.vmem [resolvable:$true] %s24
      %30 = dma.hbm_to_vmem [thread:$0]  %s1, 8832, %s25, [#allocation3], 128, 128, 8
    $region9: #{tpu_custom_call.1} parent=1 // pred_fallthru
      _
    // Predicated region
    $region10: #{tpu_custom_call.1} parent=1 // pred_check
      _
    $region11: #{tpu_custom_call.1} parent=1 // pred_check_branch
      %32 = sbr.rel (0) target = $region13
    $region12: #{tpu_custom_call.1} parent=1 // pred_region
      _
    $region13: #{tpu_custom_call.1} parent=1 // pred_fallthru
      _
    // Predicated region
    $region14: #{tpu_custom_call.1} parent=1 // pred_check
      _
    $region15: #{tpu_custom_call.1} parent=1 // pred_check_branch
      %34 = sbr.rel (0) target = $region17
    $region16: #{tpu_custom_call.1} parent=1 // pred_region
      %s36 = ssub.s32 2048, 2048
      %37 = vsyncadd [#allocation6], %s36
      %s38 = sshll.u32 [#allocation5], 4
      %s39 = int_to_ptr.vmem [resolvable:$true] %s38
      %44 = dma.hbm_to_vmem [thread:$0]  %s3, 2048, %s39, [#allocation6], 64, 64, 4
    $region17: #{tpu_custom_call.1} parent=1 // pred_fallthru
      _
    // Predicated region
    $region18: #{tpu_custom_call.1} parent=1 // pred_check
      _
    $region19: #{tpu_custom_call.1} parent=1 // pred_check_branch
      %46 = sbr.rel (0) target = $region21
    $region20: #{tpu_custom_call.1} parent=1 // pred_region
      _
    $region21: #{tpu_custom_call.1} parent=1 // pred_fallthru
      _
    // Predicated region
    $region22: #{tpu_custom_call.1} parent=1 // pred_check
      _
    $region23: #{tpu_custom_call.1} parent=1 // pred_check_branch
      %48 = sbr.rel (0) target = $region25
    $region24: #{tpu_custom_call.1} parent=1 // pred_region
      _
    $region25: #{tpu_custom_call.1} parent=1 // pred_fallthru
      _
    // Predicated region
    $region26: #{tpu_custom_call.1} parent=1 // pred_check
      _
    $region27: #{tpu_custom_call.1} parent=1 // pred_check_branch
      %50 = sbr.rel (0) target = $region29
    $region28: #{tpu_custom_call.1} parent=1 // pred_region
      _
    $region29: #{tpu_custom_call.1} parent=1 // pred_fallthru
      _
    // Predicated region
    $region30: #{tpu_custom_call.1} parent=1 // pred_check
      _
    $region31: #{tpu_custom_call.1} parent=1 // pred_check_branch
      %52 = sbr.rel (0) target = $region33
    $region32: #{tpu_custom_call.1} parent=1 // pred_region
      _
    $region33: #{tpu_custom_call.1} parent=1 // pred_fallthru
      _
    // Predicated region
    $region34: #{tpu_custom_call.1} parent=1 // pred_check
      _
    $region35: #{tpu_custom_call.1} parent=1 // pred_check_branch
      %54 = sbr.rel (0) target = $region37
    $region36: #{tpu_custom_call.1} parent=1 // pred_region
      _
    $region37: #{tpu_custom_call.1} parent=1 // pred_fallthru
      _
    // Predicated region
    $region38: #{tpu_custom_call.1} parent=1 // pred_check
      _
    $region39: #{tpu_custom_call.1} parent=1 // pred_check_branch
      %56 = sbr.rel (0) target = $region41
    $region40: #{tpu_custom_call.1} parent=1 // pred_region
      %57 = dma.done [#allocation3], 8832
    $region41: #{tpu_custom_call.1} parent=1 // pred_fallthru
      _
    // Predicated region
    $region42: #{tpu_custom_call.1} parent=1 // pred_check
      _
    $region43: #{tpu_custom_call.1} parent=1 // pred_check_branch
      %59 = sbr.rel (0) target = $region45
    $region44: #{tpu_custom_call.1} parent=1 // pred_region
      %60 = dma.done [#allocation6], 2048
    $region45: #{tpu_custom_call.1} parent=1 // pred_fallthru
      _
    %v62 = vld [vmem:[%s0] sm:$0xff]
    %v63 = vld [vmem:[%s0 + $0x8] sm:$0xff]
    %v64 = vld [vmem:[%s0 + $0x10] sm:$0xf]
    %v65 = vld [vmem:[%s0 + $0x14] sm:$0xff]
    %v66 = vld [vmem:[%s0 + $0x1c] sm:$0xff]
    %v67 = vld [vmem:[%s0 + $0x24] sm:$0xf]
    %v68 = vld [vmem:[#allocation2] sm:$0xff]
    %v69 = vld [vmem:[#allocation2 + $0x8] sm:$0xff]
    %v70 = vld [vmem:[#allocation2 + $0x10] sm:$0xff]
    %v71 = vld [vmem:[#allocation2 + $0x18] sm:$0xff]
    %v72 = vld [vmem:[#allocation2 + $0x20] sm:$0xff]
    %v73 = vld [vmem:[#allocation2 + $0x28] sm:$0xff]
    %v74 = vld [vmem:[#allocation2 + $0x30] sm:$0xff]
    %v75 = vld [vmem:[#allocation2 + $0x38] sm:$0xff]
    %v76 = vld [vmem:[#allocation2 + $0x40] sm:$0xff]
    %v77 = vld [vmem:[#allocation2 + $0x48] sm:$0xff]
    %v78 = vld [vmem:[#allocation2 + $0x50] sm:$0xff]
    %v79 = vld [vmem:[#allocation2 + $0x58] sm:$0xff]
    %v80 = vld [vmem:[#allocation2 + $0x60] sm:$0xff]
    %v81 = vld [vmem:[#allocation2 + $0x68] sm:$0xff]
    %v82 = vld [vmem:[#allocation2 + $0x70] sm:$0xff]
    %v83 = vld [vmem:[#allocation2 + $0x78] sm:$0xff]
    %v84 = vld [vmem:[#allocation2 + $0x80] sm:$0xff]
    %v85 = vld [vmem:[#allocation2 + $0x88] sm:$0xff]
    %v86 = vld [vmem:[#allocation2 + $0x90] sm:$0xff]
    %v87 = vld [vmem:[#allocation2 + $0x98] sm:$0xff]
    %v88 = vld [vmem:[#allocation2 + $0xa0] sm:$0xff]
    %v89 = vld [vmem:[#allocation2 + $0xa8] sm:$0xff]
    %v90 = vld [vmem:[#allocation2 + $0xb0] sm:$0xff]
    %v91 = vld [vmem:[#allocation2 + $0xb8] sm:$0xff]
    %v92 = vld [vmem:[#allocation2 + $0xc0] sm:$0xff]
    %v93 = vld [vmem:[#allocation2 + $0xc8] sm:$0xff]
    %v94 = vld [vmem:[#allocation2 + $0xd0] sm:$0xff]
    %v95 = vld [vmem:[#allocation2 + $0xd8] sm:$0xff]
    %v96 = vld [vmem:[#allocation2 + $0xe0] sm:$0xff]
    %v97 = vld [vmem:[#allocation2 + $0xe8] sm:$0xff]
    %v98 = vld [vmem:[#allocation2 + $0xf0] sm:$0xff]
    %v99 = vld [vmem:[#allocation2 + $0xf8] sm:$0xff]
    %v100 = vld [vmem:[#allocation2 + $0x100] sm:$0xff]
    %v101 = vld [vmem:[#allocation2 + $0x108] sm:$0xff]
    %v102 = vld [vmem:[#allocation2 + $0x110] sm:$0xff]
    %v103 = vld [vmem:[#allocation2 + $0x118] sm:$0xff]
    %v104 = vld [vmem:[#allocation2 + $0x120] sm:$0xff]
    %v105 = vld [vmem:[#allocation2 + $0x128] sm:$0xff]
    %v106 = vld [vmem:[#allocation2 + $0x130] sm:$0xff]
    %v107 = vld [vmem:[#allocation2 + $0x138] sm:$0xff]
    %v108 = vld [vmem:[#allocation2 + $0x140] sm:$0xff]
    %v109 = vld [vmem:[#allocation2 + $0x148] sm:$0xff]
    %v110 = vld [vmem:[#allocation2 + $0x150] sm:$0xff]
    %v111 = vld [vmem:[#allocation2 + $0x158] sm:$0xff]
    %v112 = vld [vmem:[#allocation2 + $0x160] sm:$0xff]
    %v113 = vld [vmem:[#allocation2 + $0x168] sm:$0xff]
    %v114 = vld [vmem:[#allocation2 + $0x170] sm:$0xff]
    %v115 = vld [vmem:[#allocation2 + $0x178] sm:$0xff]
    %v116 = vld [vmem:[#allocation2 + $0x180] sm:$0xff]
    %v117 = vld [vmem:[#allocation2 + $0x188] sm:$0xff]
    %v118 = vld [vmem:[#allocation2 + $0x190] sm:$0xff]
    %v119 = vld [vmem:[#allocation2 + $0x198] sm:$0xff]
    %v120 = vld [vmem:[#allocation2 + $0x1a0] sm:$0xff]
    %v121 = vld [vmem:[#allocation2 + $0x1a8] sm:$0xff]
    %v122 = vld [vmem:[#allocation2 + $0x1b0] sm:$0xff]
    %v123 = vld [vmem:[#allocation2 + $0x1b8] sm:$0xff]
    %v124 = vld [vmem:[#allocation2 + $0x1c0] sm:$0xff]
    %v125 = vld [vmem:[#allocation2 + $0x1c8] sm:$0xff]
    %v126 = vld [vmem:[#allocation2 + $0x1d0] sm:$0xff]
    %v127 = vld [vmem:[#allocation2 + $0x1d8] sm:$0xff]
    %v128 = vld [vmem:[#allocation2 + $0x1e0] sm:$0xff]
    %v129 = vld [vmem:[#allocation2 + $0x1e8] sm:$0xff]
    %v130 = vld [vmem:[#allocation2 + $0x1f0] sm:$0xff]
    %v131 = vld [vmem:[#allocation2 + $0x1f8] sm:$0xff]
    %v132 = vld [vmem:[#allocation2 + $0x200] sm:$0xff]
    %v133 = vld [vmem:[#allocation2 + $0x208] sm:$0xff]
    %v134 = vld [vmem:[#allocation2 + $0x210] sm:$0xff]
    %v135 = vld [vmem:[#allocation2 + $0x218] sm:$0xff]
    %v136 = vld [vmem:[#allocation2 + $0x220] sm:$0x77]
    %v137 = vld [vmem:[%s2] sm:$0x3]
    %v139 = vlaneseq
    %v140 = vshrl.u32 %v139, 7
    %v141 = vsub.s32 0, %v140
    %v142 = vrot.slane %v137, %v141
    %v143 = vlaneseq
    %v144 = vshrl.u32 %v143, 7
    %v145 = vsub.s32 1, %v144
    %v146 = vrot.slane %v137, %v145
    %v155 = vunpack.c.l.b16 %v62
    %v156 = vunpack.c.h.b16 %v62
    %v157 = vunpack.c.l.b16 %v63
    %v158 = vunpack.c.h.b16 %v63
    %v159 = vunpack.c.l.b16 %v64
    %v160 = vunpack.c.l.b16 %v65
    %v161 = vunpack.c.h.b16 %v65
    %v162 = vunpack.c.l.b16 %v66
    %v163 = vunpack.c.h.b16 %v66
    %v164 = vunpack.c.l.b16 %v67
    %v165 = vpack.c.b16 %v160, %v155
    %v166 = vpack.c.b16 %v161, %v156
    %v167 = vpack.c.b16 %v162, %v157
    %v168 = vpack.c.b16 %v163, %v158
    %v169 = vpack.c.b16 %v164, %v159
    %v243 = vunpack.c.l.b16 %v68
    %v244 = vunpack.c.h.b16 %v68
    %v245 = vunpack.c.l.b16 %v69
    %v246 = vunpack.c.h.b16 %v69
    %v247 = vunpack.c.l.b16 %v70
    %v248 = vunpack.c.h.b16 %v70
    %v249 = vunpack.c.l.b16 %v71
    %v250 = vunpack.c.h.b16 %v71
    %v251 = vunpack.c.l.b16 %v72
    %v252 = vunpack.c.h.b16 %v72
    %v253 = vunpack.c.l.b16 %v73
    %v254 = vunpack.c.h.b16 %v73
    %v255 = vunpack.c.l.b16 %v74
    %v256 = vunpack.c.h.b16 %v74
    %v257 = vunpack.c.l.b16 %v75
    %v258 = vunpack.c.h.b16 %v75
    %v259 = vunpack.c.l.b16 %v76
    %v260 = vunpack.c.h.b16 %v76
    %v261 = vunpack.c.l.b16 %v77
    %v262 = vunpack.c.h.b16 %v77
    %v263 = vunpack.c.l.b16 %v78
    %v264 = vunpack.c.h.b16 %v78
    %v265 = vunpack.c.l.b16 %v79
    %v266 = vunpack.c.h.b16 %v79
    %v267 = vunpack.c.l.b16 %v80
    %v268 = vunpack.c.h.b16 %v80
    %v269 = vunpack.c.l.b16 %v81
    %v270 = vunpack.c.h.b16 %v81
    %v271 = vunpack.c.l.b16 %v82
    %v272 = vunpack.c.h.b16 %v82
    %v273 = vunpack.c.l.b16 %v83
    %v274 = vunpack.c.h.b16 %v83
    %v275 = vunpack.c.l.b16 %v84
    %v276 = vunpack.c.h.b16 %v84
    %v277 = vunpack.c.l.b16 %v85
    %v278 = vunpack.c.h.b16 %v85
    %v279 = vunpack.c.l.b16 %v86
    %v280 = vunpack.c.h.b16 %v86
    %v281 = vunpack.c.l.b16 %v87
    %v282 = vunpack.c.h.b16 %v87
    %v283 = vunpack.c.l.b16 %v88
    %v284 = vunpack.c.h.b16 %v88
    %v285 = vunpack.c.l.b16 %v89
    %v286 = vunpack.c.h.b16 %v89
    %v287 = vunpack.c.l.b16 %v90
    %v288 = vunpack.c.h.b16 %v90
    %v289 = vunpack.c.l.b16 %v91
    %v290 = vunpack.c.h.b16 %v91
    %v291 = vunpack.c.l.b16 %v92
    %v292 = vunpack.c.h.b16 %v92
    %v293 = vunpack.c.l.b16 %v93
    %v294 = vunpack.c.h.b16 %v93
    %v295 = vunpack.c.l.b16 %v94
    %v296 = vunpack.c.h.b16 %v94
    %v297 = vunpack.c.l.b16 %v95
    %v298 = vunpack.c.h.b16 %v95
    %v299 = vunpack.c.l.b16 %v96
    %v300 = vunpack.c.h.b16 %v96
    %v301 = vunpack.c.l.b16 %v97
    %v302 = vunpack.c.h.b16 %v97
    %v303 = vunpack.c.l.b16 %v98
    %v304 = vunpack.c.h.b16 %v98
    %v305 = vunpack.c.l.b16 %v99
    %v306 = vunpack.c.h.b16 %v99
    %v307 = vunpack.c.l.b16 %v100
    %v308 = vunpack.c.h.b16 %v100
    %v309 = vunpack.c.l.b16 %v101
    %v310 = vunpack.c.h.b16 %v101
    %v311 = vunpack.c.l.b16 %v102
    %v312 = vunpack.c.h.b16 %v102
    %v313 = vunpack.c.l.b16 %v103
    %v314 = vunpack.c.h.b16 %v103
    %v315 = vunpack.c.l.b16 %v104
    %v316 = vunpack.c.h.b16 %v104
    %v317 = vunpack.c.l.b16 %v105
    %v318 = vunpack.c.h.b16 %v105
    %v319 = vunpack.c.l.b16 %v106
    %v320 = vunpack.c.h.b16 %v106
    %v321 = vunpack.c.l.b16 %v107
    %v322 = vunpack.c.h.b16 %v107
    %v323 = vunpack.c.l.b16 %v108
    %v324 = vunpack.c.h.b16 %v108
    %v325 = vunpack.c.l.b16 %v109
    %v326 = vunpack.c.h.b16 %v109
    %v327 = vunpack.c.l.b16 %v110
    %v328 = vunpack.c.h.b16 %v110
    %v329 = vunpack.c.l.b16 %v111
    %v330 = vunpack.c.h.b16 %v111
    %v331 = vunpack.c.l.b16 %v112
    %v332 = vunpack.c.h.b16 %v112
    %v333 = vunpack.c.l.b16 %v113
    %v334 = vunpack.c.h.b16 %v113
    %v335 = vunpack.c.l.b16 %v114
    %v336 = vunpack.c.h.b16 %v114
    %v337 = vunpack.c.l.b16 %v115
    %v338 = vunpack.c.h.b16 %v115
    %v339 = vunpack.c.l.b16 %v116
    %v340 = vunpack.c.h.b16 %v116
    %v341 = vunpack.c.l.b16 %v117
    %v342 = vunpack.c.h.b16 %v117
    %v343 = vunpack.c.l.b16 %v118
    %v344 = vunpack.c.h.b16 %v118
    %v345 = vunpack.c.l.b16 %v119
    %v346 = vunpack.c.h.b16 %v119
    %v347 = vunpack.c.l.b16 %v120
    %v348 = vunpack.c.h.b16 %v120
    %v349 = vunpack.c.l.b16 %v121
    %v350 = vunpack.c.h.b16 %v121
    %v351 = vunpack.c.l.b16 %v122
    %v352 = vunpack.c.h.b16 %v122
    %v353 = vunpack.c.l.b16 %v123
    %v354 = vunpack.c.h.b16 %v123
    %v355 = vunpack.c.l.b16 %v124
    %v356 = vunpack.c.h.b16 %v124
    %v357 = vunpack.c.l.b16 %v125
    %v358 = vunpack.c.h.b16 %v125
    %v359 = vunpack.c.l.b16 %v126
    %v360 = vunpack.c.h.b16 %v126
    %v361 = vunpack.c.l.b16 %v127
    %v362 = vunpack.c.h.b16 %v127
    %v363 = vunpack.c.l.b16 %v128
    %v364 = vunpack.c.h.b16 %v128
    %v365 = vunpack.c.l.b16 %v129
    %v366 = vunpack.c.h.b16 %v129
    %v367 = vunpack.c.l.b16 %v130
    %v368 = vunpack.c.h.b16 %v130
    %v369 = vunpack.c.l.b16 %v131
    %v370 = vunpack.c.h.b16 %v131
    %v371 = vunpack.c.l.b16 %v132
    %v372 = vunpack.c.h.b16 %v132
    %v373 = vunpack.c.l.b16 %v133
    %v374 = vunpack.c.h.b16 %v133
    %v375 = vunpack.c.l.b16 %v134
    %v376 = vunpack.c.h.b16 %v134
    %v377 = vunpack.c.l.b16 %v135
    %v378 = vunpack.c.h.b16 %v135
    %v379 = vunpack.c.l.b16 %v136
    %v380 = vunpack.c.h.b16 %v136
    %v381 = vpack.c.b16 %v245, %v243
    %v382 = vpack.c.b16 %v246, %v244
    %v383 = vpack.c.b16 %v249, %v247
    %v384 = vpack.c.b16 %v250, %v248
    %v385 = vpack.c.b16 %v253, %v251
    %v386 = vpack.c.b16 %v254, %v252
    %v387 = vpack.c.b16 %v257, %v255
    %v388 = vpack.c.b16 %v258, %v256
    %v389 = vpack.c.b16 %v261, %v259
    %v390 = vpack.c.b16 %v262, %v260
    %v391 = vpack.c.b16 %v265, %v263
    %v392 = vpack.c.b16 %v266, %v264
    %v393 = vpack.c.b16 %v269, %v267
    %v394 = vpack.c.b16 %v270, %v268
    %v395 = vpack.c.b16 %v273, %v271
    %v396 = vpack.c.b16 %v274, %v272
    %v397 = vpack.c.b16 %v277, %v275
    %v398 = vpack.c.b16 %v278, %v276
    %v399 = vpack.c.b16 %v281, %v279
    %v400 = vpack.c.b16 %v282, %v280
    %v401 = vpack.c.b16 %v285, %v283
    %v402 = vpack.c.b16 %v286, %v284
    %v403 = vpack.c.b16 %v289, %v287
    %v404 = vpack.c.b16 %v290, %v288
    %v405 = vpack.c.b16 %v293, %v291
    %v406 = vpack.c.b16 %v294, %v292
    %v407 = vpack.c.b16 %v297, %v295
    %v408 = vpack.c.b16 %v298, %v296
    %v409 = vpack.c.b16 %v301, %v299
    %v410 = vpack.c.b16 %v302, %v300
    %v411 = vpack.c.b16 %v305, %v303
    %v412 = vpack.c.b16 %v306, %v304
    %v413 = vpack.c.b16 %v309, %v307
    %v414 = vpack.c.b16 %v310, %v308
    %v415 = vpack.c.b16 %v313, %v311
    %v416 = vpack.c.b16 %v314, %v312
    %v417 = vpack.c.b16 %v317, %v315
    %v418 = vpack.c.b16 %v318, %v316
    %v419 = vpack.c.b16 %v321, %v319
    %v420 = vpack.c.b16 %v322, %v320
    %v421 = vpack.c.b16 %v325, %v323
    %v422 = vpack.c.b16 %v326, %v324
    %v423 = vpack.c.b16 %v329, %v327
    %v424 = vpack.c.b16 %v330, %v328
    %v425 = vpack.c.b16 %v333, %v331
    %v426 = vpack.c.b16 %v334, %v332
    %v427 = vpack.c.b16 %v337, %v335
    %v428 = vpack.c.b16 %v338, %v336
    %v429 = vpack.c.b16 %v341, %v339
    %v430 = vpack.c.b16 %v342, %v340
    %v431 = vpack.c.b16 %v345, %v343
    %v432 = vpack.c.b16 %v346, %v344
    %v433 = vpack.c.b16 %v349, %v347
    %v434 = vpack.c.b16 %v350, %v348
    %v435 = vpack.c.b16 %v353, %v351
    %v436 = vpack.c.b16 %v354, %v352
    %v437 = vpack.c.b16 %v357, %v355
    %v438 = vpack.c.b16 %v358, %v356
    %v439 = vpack.c.b16 %v361, %v359
    %v440 = vpack.c.b16 %v362, %v360
    %v441 = vpack.c.b16 %v365, %v363
    %v442 = vpack.c.b16 %v366, %v364
    %v443 = vpack.c.b16 %v369, %v367
    %v444 = vpack.c.b16 %v370, %v368
    %v445 = vpack.c.b16 %v373, %v371
    %v446 = vpack.c.b16 %v374, %v372
    %v447 = vpack.c.b16 %v377, %v375
    %v448 = vpack.c.b16 %v378, %v376
    %v449 = vpack.c.b16 %v379, %v379
    %v450 = vpack.c.b16 %v380, %v380
    %vm519 = vcmask 302080
    %v521 = vsel %vm519, %v169, 0
    %vm523 = vcmask 1041408
    %vm524 = vcmask 1042432
    %v525 = vsel %vm523, 4294967295, 65535
    %v526 = vsel %vm524, %v525, 0
    %v528 = vand.u32 %v449, %v526
    %v531 = vand.u32 %v450, %v526
    %533 = vmatprep.subr.bf16.mxu0 %v396
    %534 = vmatpush1.bf16.msra.mxu0 %v395
    %535 = vmatprep.subr.bf16.mxu0 %v394
    %536 = vmatpush1.bf16.msra.mxu0 %v393
    %537 = vmatprep.subr.bf16.mxu0 %v392
    %538 = vmatpush1.bf16.msra.mxu0 %v391
    %539 = vmatprep.subr.bf16.mxu0 %v390
    %540 = vmatpush1.bf16.msra.mxu0 %v389
    %541 = vmatprep.subr.bf16.mxu0 %v388
    %542 = vmatpush1.bf16.msra.mxu0 %v387
    %543 = vmatprep.subr.bf16.mxu0 %v386
    %544 = vmatpush1.bf16.msra.mxu0 %v385
    %545 = vmatprep.subr.bf16.mxu0 %v384
    %546 = vmatpush1.bf16.msra.mxu0 %v383
    %547 = vmatprep.subr.bf16.mxu0 %v382
    %548 = vmatpush1.bf16.msra.mxu0 %v381
    %549 = vmatprep.subr.bf16.mxu0 %v412
    %550 = vmatpush2.bf16.msra.mxu0 %v411
    %551 = vmatprep.subr.bf16.mxu0 %v410
    %552 = vmatpush2.bf16.msra.mxu0 %v409
    %553 = vmatprep.subr.bf16.mxu0 %v408
    %554 = vmatpush2.bf16.msra.mxu0 %v407
    %555 = vmatprep.subr.bf16.mxu0 %v406
    %556 = vmatpush2.bf16.msra.mxu0 %v405
    %557 = vmatprep.subr.bf16.mxu0 %v404
    %558 = vmatpush2.bf16.msra.mxu0 %v403
    %559 = vmatprep.subr.bf16.mxu0 %v402
    %560 = vmatpush2.bf16.msra.mxu0 %v401
    %561 = vmatprep.subr.bf16.mxu0 %v400
    %562 = vmatpush2.bf16.msra.mxu0 %v399
    %563 = vmatprep.subr.bf16.mxu0 %v398
    %564 = vmatpush2.bf16.msra.mxu0 %v397
    %565 = vmatprep.mubr.bf16.mxu0 %v166
    %566 = vmatmul.mubr.bf16.gmra.mxu0 %v165
    %v567 = vpop.f32.mrf.mxu0
    %v568 = vadd.f32 %v142, %v567
    %v569 = vpop.f32.mrf.mxu0
    %v570 = vadd.f32 %v146, %v569
    %v571 = vpop.f32.mrf.mxu0
    %v572 = vadd.f32 %v142, %v571
    %v573 = vpop.f32.mrf.mxu0
    %v574 = vadd.f32 %v146, %v573
    %575 = vdwg.mxu0
    %576 = vmatprep.subr.bf16.mxu0 %v428
    %577 = vmatpush1.bf16.msra.mxu0 %v427
    %578 = vmatprep.subr.bf16.mxu0 %v426
    %579 = vmatpush1.bf16.msra.mxu0 %v425
    %580 = vmatprep.subr.bf16.mxu0 %v424
    %581 = vmatpush1.bf16.msra.mxu0 %v423
    %582 = vmatprep.subr.bf16.mxu0 %v422
    %583 = vmatpush1.bf16.msra.mxu0 %v421
    %584 = vmatprep.subr.bf16.mxu0 %v420
    %585 = vmatpush1.bf16.msra.mxu0 %v419
    %586 = vmatprep.subr.bf16.mxu0 %v418
    %587 = vmatpush1.bf16.msra.mxu0 %v417
    %588 = vmatprep.subr.bf16.mxu0 %v416
    %589 = vmatpush1.bf16.msra.mxu0 %v415
    %590 = vmatprep.subr.bf16.mxu0 %v414
    %591 = vmatpush1.bf16.msra.mxu0 %v413
    %592 = vmatprep.subr.bf16.mxu0 %v444
    %593 = vmatpush2.bf16.msra.mxu0 %v443
    %594 = vmatprep.subr.bf16.mxu0 %v442
    %595 = vmatpush2.bf16.msra.mxu0 %v441
    %596 = vmatprep.subr.bf16.mxu0 %v440
    %597 = vmatpush2.bf16.msra.mxu0 %v439
    %598 = vmatprep.subr.bf16.mxu0 %v438
    %599 = vmatpush2.bf16.msra.mxu0 %v437
    %600 = vmatprep.subr.bf16.mxu0 %v436
    %601 = vmatpush2.bf16.msra.mxu0 %v435
    %602 = vmatprep.subr.bf16.mxu0 %v434
    %603 = vmatpush2.bf16.msra.mxu0 %v433
    %604 = vmatprep.subr.bf16.mxu0 %v432
    %605 = vmatpush2.bf16.msra.mxu0 %v431
    %606 = vmatprep.subr.bf16.mxu0 %v430
    %607 = vmatpush2.bf16.msra.mxu0 %v429
    %608 = vmatprep.mubr.bf16.mxu0 %v168
    %609 = vmatmul.mubr.bf16.gmra.mxu0 %v167
    %v610 = vpop.f32.mrf.mxu0
    %v611 = vadd.f32 %v568, %v610
    %v612 = vpop.f32.mrf.mxu0
    %v613 = vadd.f32 %v570, %v612
    %v614 = vpop.f32.mrf.mxu0
    %v615 = vadd.f32 %v572, %v614
    %v616 = vpop.f32.mrf.mxu0
    %v617 = vadd.f32 %v574, %v616
    %618 = vdwg.mxu0
    %619 = vmatprep.subr.bf16.mxu0 0
    %620 = vmatpush1.bf16.msra.mxu0 0
    %621 = vmatprep.subr.bf16.mxu0 0
    %622 = vmatpush1.bf16.msra.mxu0 0
    %623 = vmatprep.subr.bf16.mxu0 0
    %624 = vmatpush1.bf16.msra.mxu0 0
    %625 = vmatprep.subr.bf16.mxu0 0
    %626 = vmatpush1.bf16.msra.mxu0 0
    %627 = vmatprep.subr.bf16.mxu0 0
    %628 = vmatpush1.bf16.msra.mxu0 0
    %629 = vmatprep.subr.bf16.mxu0 %v531
    %630 = vmatpush1.bf16.msra.mxu0 %v528
    %631 = vmatprep.subr.bf16.mxu0 %v448
    %632 = vmatpush1.bf16.msra.mxu0 %v447
    %633 = vmatprep.subr.bf16.mxu0 %v446
    %634 = vmatpush1.bf16.msra.mxu0 %v445
    %635 = vmatprep.subr.bf16.mxu0 0
    %636 = vmatpush2.bf16.msra.mxu0 0
    %637 = vmatprep.subr.bf16.mxu0 0
    %638 = vmatpush2.bf16.msra.mxu0 0
    %639 = vmatprep.subr.bf16.mxu0 0
    %640 = vmatpush2.bf16.msra.mxu0 0
    %641 = vmatprep.subr.bf16.mxu0 0
    %642 = vmatpush2.bf16.msra.mxu0 0
    %643 = vmatprep.subr.bf16.mxu0 0
    %644 = vmatpush2.bf16.msra.mxu0 0
    %645 = vmatprep.subr.bf16.mxu0 0
    %646 = vmatpush2.bf16.msra.mxu0 0
    %647 = vmatprep.subr.bf16.mxu0 0
    %648 = vmatpush2.bf16.msra.mxu0 0
    %649 = vmatprep.subr.bf16.mxu0 0
    %650 = vmatpush2.bf16.msra.mxu0 0
    %651 = vmatprep.mubr.bf16.mxu0 0
    %652 = vmatmul.mubr.bf16.gmra.mxu0 %v521
    %v653 = vpop.f32.mrf.mxu0
    %v654 = vadd.f32 %v611, %v653
    %v655 = vpop.f32.mrf.mxu0
    %v656 = vadd.f32 %v613, %v655
    %v657 = vpop.f32.mrf.mxu0
    %v658 = vadd.f32 %v615, %v657
    %v659 = vpop.f32.mrf.mxu0
    %v660 = vadd.f32 %v617, %v659
    %661 = vdwg.mxu0
    %v662 = vmul.f32 %v654, 0.5
    %v663 = vmul.f32 %v656, 0.5
    %v664 = vmul.f32 %v658, 0.5
    %v665 = vmul.f32 %v660, 0.5
    %v666 = vmul.f32 %v654, 0.70710677
    %v667 = vmul.f32 %v656, 0.70710677
    %v668 = vmul.f32 %v658, 0.70710677
    %v669 = vmul.f32 %v660, 0.70710677
    %v670 = verf.f32.pop %v666
    %v671 = verf.f32.pop %v667
    %v672 = verf.f32.pop %v668
    %v673 = verf.f32.pop %v669
    %v674 = vadd.f32 %v670, 1.0
    %v675 = vadd.f32 %v671, 1.0
    %v676 = vadd.f32 %v672, 1.0
    %v677 = vadd.f32 %v673, 1.0
    %v678 = vmul.f32 %v662, %v674
    %v679 = vmul.f32 %v663, %v675
    %v680 = vmul.f32 %v664, %v676
    %v681 = vmul.f32 %v665, %v677
    %v682 = vpack.c.bf16 %v680, %v678
    %v683 = vpack.c.bf16 %v681, %v679
    %v684 = vld [vmem:[#allocation5] sm:$0xf]
    %v685 = vld [vmem:[#allocation5 + $0x4] sm:$0xf]
    %v686 = vld [vmem:[#allocation5 + $0x8] sm:$0xf]
    %v687 = vld [vmem:[#allocation5 + $0xc] sm:$0xf]
    %v688 = vld [vmem:[#allocation5 + $0x10] sm:$0xf]
    %v689 = vld [vmem:[#allocation5 + $0x14] sm:$0xf]
    %v690 = vld [vmem:[#allocation5 + $0x18] sm:$0xf]
    %v691 = vld [vmem:[#allocation5 + $0x1c] sm:$0xf]
    %v692 = vld [vmem:[#allocation5 + $0x20] sm:$0xf]
    %v693 = vld [vmem:[#allocation5 + $0x24] sm:$0xf]
    %v694 = vld [vmem:[#allocation5 + $0x28] sm:$0xf]
    %v695 = vld [vmem:[#allocation5 + $0x2c] sm:$0xf]
    %v696 = vld [vmem:[#allocation5 + $0x30] sm:$0xf]
    %v697 = vld [vmem:[#allocation5 + $0x34] sm:$0xf]
    %v698 = vld [vmem:[#allocation5 + $0x38] sm:$0xf]
    %v699 = vld [vmem:[#allocation5 + $0x3c] sm:$0xf]
    %v700 = vld [vmem:[#allocation5 + $0x40] sm:$0xf]
    %v701 = vld [vmem:[#allocation5 + $0x44] sm:$0xf]
    %v702 = vld [vmem:[#allocation5 + $0x48] sm:$0xf]
    %v703 = vld [vmem:[#allocation5 + $0x4c] sm:$0xf]
    %v704 = vld [vmem:[#allocation5 + $0x50] sm:$0xf]
    %v705 = vld [vmem:[#allocation5 + $0x54] sm:$0xf]
    %v706 = vld [vmem:[#allocation5 + $0x58] sm:$0xf]
    %v707 = vld [vmem:[#allocation5 + $0x5c] sm:$0xf]
    %v708 = vld [vmem:[#allocation5 + $0x60] sm:$0xf]
    %v709 = vld [vmem:[#allocation5 + $0x64] sm:$0xf]
    %v710 = vld [vmem:[#allocation5 + $0x68] sm:$0xf]
    %v711 = vld [vmem:[#allocation5 + $0x6c] sm:$0xf]
    %v712 = vld [vmem:[#allocation5 + $0x70] sm:$0xf]
    %v713 = vld [vmem:[#allocation5 + $0x74] sm:$0xf]
    %v714 = vld [vmem:[#allocation5 + $0x78] sm:$0xf]
    %v715 = vld [vmem:[#allocation5 + $0x7c] sm:$0xf]
    %v716 = vld [vmem:[%s4] sm:$0x1]
    %v718 = vlaneseq
    %v719 = vshrl.u32 %v718, 7
    %v720 = vsub.s32 0, %v719
    %v721 = vrot.slane %v716, %v720
    %v755 = vunpack.c.l.b16 %v684
    %v756 = vunpack.c.l.b16 %v685
    %v757 = vunpack.c.l.b16 %v686
    %v758 = vunpack.c.l.b16 %v687
    %v759 = vunpack.c.l.b16 %v688
    %v760 = vunpack.c.l.b16 %v689
    %v761 = vunpack.c.l.b16 %v690
    %v762 = vunpack.c.l.b16 %v691
    %v763 = vunpack.c.l.b16 %v692
    %v764 = vunpack.c.l.b16 %v693
    %v765 = vunpack.c.l.b16 %v694
    %v766 = vunpack.c.l.b16 %v695
    %v767 = vunpack.c.l.b16 %v696
    %v768 = vunpack.c.l.b16 %v697
    %v769 = vunpack.c.l.b16 %v698
    %v770 = vunpack.c.l.b16 %v699
    %v771 = vunpack.c.l.b16 %v700
    %v772 = vunpack.c.l.b16 %v701
    %v773 = vunpack.c.l.b16 %v702
    %v774 = vunpack.c.l.b16 %v703
    %v775 = vunpack.c.l.b16 %v704
    %v776 = vunpack.c.l.b16 %v705
    %v777 = vunpack.c.l.b16 %v706
    %v778 = vunpack.c.l.b16 %v707
    %v779 = vunpack.c.l.b16 %v708
    %v780 = vunpack.c.l.b16 %v709
    %v781 = vunpack.c.l.b16 %v710
    %v782 = vunpack.c.l.b16 %v711
    %v783 = vunpack.c.l.b16 %v712
    %v784 = vunpack.c.l.b16 %v713
    %v785 = vunpack.c.l.b16 %v714
    %v786 = vunpack.c.l.b16 %v715
    %v787 = vpack.c.b16 %v756, %v755
    %v788 = vpack.c.b16 %v758, %v757
    %v789 = vpack.c.b16 %v760, %v759
    %v790 = vpack.c.b16 %v762, %v761
    %v791 = vpack.c.b16 %v764, %v763
    %v792 = vpack.c.b16 %v766, %v765
    %v793 = vpack.c.b16 %v768, %v767
    %v794 = vpack.c.b16 %v770, %v769
    %v795 = vpack.c.b16 %v772, %v771
    %v796 = vpack.c.b16 %v774, %v773
    %v797 = vpack.c.b16 %v776, %v775
    %v798 = vpack.c.b16 %v778, %v777
    %v799 = vpack.c.b16 %v780, %v779
    %v800 = vpack.c.b16 %v782, %v781
    %v801 = vpack.c.b16 %v784, %v783
    %v802 = vpack.c.b16 %v786, %v785
    %819 = vmatprep.subr.bf16.mxu0 0
    %820 = vmatpush1.bf16.msra.mxu0 %v794
    %821 = vmatprep.subr.bf16.mxu0 0
    %822 = vmatpush1.bf16.msra.mxu0 %v793
    %823 = vmatprep.subr.bf16.mxu0 0
    %824 = vmatpush1.bf16.msra.mxu0 %v792
    %825 = vmatprep.subr.bf16.mxu0 0
    %826 = vmatpush1.bf16.msra.mxu0 %v791
    %827 = vmatprep.subr.bf16.mxu0 0
    %828 = vmatpush1.bf16.msra.mxu0 %v790
    %829 = vmatprep.subr.bf16.mxu0 0
    %830 = vmatpush1.bf16.msra.mxu0 %v789
    %831 = vmatprep.subr.bf16.mxu0 0
    %832 = vmatpush1.bf16.msra.mxu0 %v788
    %833 = vmatprep.subr.bf16.mxu0 0
    %834 = vmatpush1.bf16.msra.mxu0 %v787
    %835 = vmatprep.subr.bf16.mxu0 0
    %836 = vmatpush2.bf16.msra.mxu0 %v802
    %837 = vmatprep.subr.bf16.mxu0 0
    %838 = vmatpush2.bf16.msra.mxu0 %v801
    %839 = vmatprep.subr.bf16.mxu0 0
    %840 = vmatpush2.bf16.msra.mxu0 %v800
    %841 = vmatprep.subr.bf16.mxu0 0
    %842 = vmatpush2.bf16.msra.mxu0 %v799
    %843 = vmatprep.subr.bf16.mxu0 0
    %844 = vmatpush2.bf16.msra.mxu0 %v798
    %845 = vmatprep.subr.bf16.mxu0 0
    %846 = vmatpush2.bf16.msra.mxu0 %v797
    %847 = vmatprep.subr.bf16.mxu0 0
    %848 = vmatpush2.bf16.msra.mxu0 %v796
    %849 = vmatprep.subr.bf16.mxu0 0
    %850 = vmatpush2.bf16.msra.mxu0 %v795
    %851 = vmatprep.mubr.bf16.mxu0 %v683
    %852 = vmatmul.mubr.bf16.gmra.mxu0 %v682
    %v853 = vpop.f32.mrf.mxu0
    %v854 = vadd.f32 %v721, %v853
    %v855 = vpop.f32.mrf.mxu0
    %v856 = vpop.f32.mrf.mxu0
    %v857 = vadd.f32 %v721, %v856
    %v858 = vpop.f32.mrf.mxu0
    %859 = vdwg.mxu0
    %v860 = vmul.f32 %v854, 0.5
    %v861 = vmul.f32 %v857, 0.5
    %v862 = vmul.f32 %v854, 0.70710677
    %v863 = vmul.f32 %v857, 0.70710677
    %v864 = verf.f32.pop %v862
    %v865 = verf.f32.pop %v863
    %v866 = vadd.f32 %v864, 1.0
    %v867 = vadd.f32 %v865, 1.0
    %v868 = vmul.f32 %v860, %v866
    %v869 = vmul.f32 %v861, %v867
    %v870 = vpack.c.bf16 %v869, %v868
    %v871 = vld [vmem:[%s5] sm:$0xf]
    %v872 = vld [vmem:[%s5 + $0x4] sm:$0xf]
    %v873 = vld [vmem:[%s5 + $0x8] sm:$0xf]
    %v874 = vld [vmem:[%s5 + $0xc] sm:$0xf]
    %v875 = vld [vmem:[%s5 + $0x10] sm:$0xf]
    %v876 = vld [vmem:[%s5 + $0x14] sm:$0xf]
    %v877 = vld [vmem:[%s5 + $0x18] sm:$0xf]
    %v878 = vld [vmem:[%s5 + $0x1c] sm:$0xf]
    %v879 = vld [vmem:[%s5 + $0x20] sm:$0xf]
    %v880 = vld [vmem:[%s5 + $0x24] sm:$0xf]
    %v881 = vld [vmem:[%s5 + $0x28] sm:$0xf]
    %v882 = vld [vmem:[%s5 + $0x2c] sm:$0xf]
    %v883 = vld [vmem:[%s5 + $0x30] sm:$0xf]
    %v884 = vld [vmem:[%s5 + $0x34] sm:$0xf]
    %v885 = vld [vmem:[%s5 + $0x38] sm:$0xf]
    %v886 = vld [vmem:[%s5 + $0x3c] sm:$0xf]
    %v887 = vld [vmem:[%s6] sm:$0x1]
    %v889 = vlaneseq
    %v890 = vshrl.u32 %v889, 7
    %v891 = vsub.s32 0, %v890
    %v892 = vrot.slane %v887, %v891
    %v910 = vunpack.c.l.b16 %v871
    %v911 = vunpack.c.l.b16 %v872
    %v912 = vunpack.c.l.b16 %v873
    %v913 = vunpack.c.l.b16 %v874
    %v914 = vunpack.c.l.b16 %v875
    %v915 = vunpack.c.l.b16 %v876
    %v916 = vunpack.c.l.b16 %v877
    %v917 = vunpack.c.l.b16 %v878
    %v918 = vunpack.c.l.b16 %v879
    %v919 = vunpack.c.l.b16 %v880
    %v920 = vunpack.c.l.b16 %v881
    %v921 = vunpack.c.l.b16 %v882
    %v922 = vunpack.c.l.b16 %v883
    %v923 = vunpack.c.l.b16 %v884
    %v924 = vunpack.c.l.b16 %v885
    %v925 = vunpack.c.l.b16 %v886
    %v926 = vpack.c.b16 %v911, %v910
    %v927 = vpack.c.b16 %v913, %v912
    %v928 = vpack.c.b16 %v915, %v914
    %v929 = vpack.c.b16 %v917, %v916
    %v930 = vpack.c.b16 %v919, %v918
    %v931 = vpack.c.b16 %v921, %v920
    %v932 = vpack.c.b16 %v923, %v922
    %v933 = vpack.c.b16 %v925, %v924
    %942 = vmatprep.subr.bf16.mxu0 0
    %943 = vmatpush1.bf16.msra.mxu0 %v933
    %944 = vmatprep.subr.bf16.mxu0 0
    %945 = vmatpush1.bf16.msra.mxu0 %v932
    %946 = vmatprep.subr.bf16.mxu0 0
    %947 = vmatpush1.bf16.msra.mxu0 %v931
    %948 = vmatprep.subr.bf16.mxu0 0
    %949 = vmatpush1.bf16.msra.mxu0 %v930
    %950 = vmatprep.subr.bf16.mxu0 0
    %951 = vmatpush1.bf16.msra.mxu0 %v929
    %952 = vmatprep.subr.bf16.mxu0 0
    %953 = vmatpush1.bf16.msra.mxu0 %v928
    %954 = vmatprep.subr.bf16.mxu0 0
    %955 = vmatpush1.bf16.msra.mxu0 %v927
    %956 = vmatprep.subr.bf16.mxu0 0
    %957 = vmatpush1.bf16.msra.mxu0 %v926
    %958 = vmatprep.subr.bf16.mxu0 0
    %959 = vmatpush2.bf16.msra.mxu0 0
    %960 = vmatprep.subr.bf16.mxu0 0
    %961 = vmatpush2.bf16.msra.mxu0 0
    %962 = vmatprep.subr.bf16.mxu0 0
    %963 = vmatpush2.bf16.msra.mxu0 0
    %964 = vmatprep.subr.bf16.mxu0 0
    %965 = vmatpush2.bf16.msra.mxu0 0
    %966 = vmatprep.subr.bf16.mxu0 0
    %967 = vmatpush2.bf16.msra.mxu0 0
    %968 = vmatprep.subr.bf16.mxu0 0
    %969 = vmatpush2.bf16.msra.mxu0 0
    %970 = vmatprep.subr.bf16.mxu0 0
    %971 = vmatpush2.bf16.msra.mxu0 0
    %972 = vmatprep.subr.bf16.mxu0 0
    %973 = vmatpush2.bf16.msra.mxu0 0
    %974 = vmatprep.mubr.bf16.mxu0 0
    %975 = vmatmul.mubr.bf16.gmra.mxu0 %v870
    %v976 = vpop.f32.mrf.mxu0
    %v977 = vadd.f32 %v892, %v976
    %v978 = vpop.f32.mrf.mxu0
    %v979 = vpop.f32.mrf.mxu0
    %v980 = vadd.f32 %v892, %v979
    %v981 = vpop.f32.mrf.mxu0
    %982 = vdwg.mxu0
    %v983 = vmul.f32 %v977, 0.5
    %v984 = vmul.f32 %v980, 0.5
    %v985 = vmul.f32 %v977, 0.70710677
    %v986 = vmul.f32 %v980, 0.70710677
    %v987 = verf.f32.pop %v985
    %v988 = verf.f32.pop %v986
    %v989 = vadd.f32 %v987, 1.0
    %v990 = vadd.f32 %v988, 1.0
    %v991 = vmul.f32 %v983, %v989
    %v992 = vmul.f32 %v984, %v990
    %v993 = vpack.c.bf16 %v992, %v991
    %v994 = vld [vmem:[%s7] sm:$0xf]
    %v995 = vld [vmem:[%s7 + $0x4] sm:$0xf]
    %v996 = vld [vmem:[%s7 + $0x8] sm:$0xf]
    %v997 = vld [vmem:[%s7 + $0xc] sm:$0xf]
    %v998 = vld [vmem:[%s7 + $0x10] sm:$0xf]
    %v999 = vld [vmem:[%s7 + $0x14] sm:$0xf]
    %v1000 = vld [vmem:[%s7 + $0x18] sm:$0xf]
    %v1001 = vld [vmem:[%s7 + $0x1c] sm:$0xf]
    %v1002 = vld [vmem:[%s8] sm:$0x1]
    %v1004 = vlaneseq
    %v1005 = vshrl.u32 %v1004, 7
    %v1006 = vsub.s32 0, %v1005
    %v1007 = vrot.slane %v1002, %v1006
    %v1017 = vunpack.c.l.b16 %v994
    %v1018 = vunpack.c.l.b16 %v995
    %v1019 = vunpack.c.l.b16 %v996
    %v1020 = vunpack.c.l.b16 %v997
    %v1021 = vunpack.c.l.b16 %v998
    %v1022 = vunpack.c.l.b16 %v999
    %v1023 = vunpack.c.l.b16 %v1000
    %v1024 = vunpack.c.l.b16 %v1001
    %v1025 = vpack.c.b16 %v1018, %v1017
    %v1026 = vpack.c.b16 %v1020, %v1019
    %v1027 = vpack.c.b16 %v1022, %v1021
    %v1028 = vpack.c.b16 %v1024, %v1023
    %vm1033 = vcmask 523264
    %v1035 = vsel %vm1033, %v993, 0
    %1037 = vmatprep.subr.bf16.mxu0 0
    %1038 = vmatpush1.bf16.msra.mxu0 0
    %1039 = vmatprep.subr.bf16.mxu0 0
    %1040 = vmatpush1.bf16.msra.mxu0 0
    %1041 = vmatprep.subr.bf16.mxu0 0
    %1042 = vmatpush1.bf16.msra.mxu0 0
    %1043 = vmatprep.subr.bf16.mxu0 0
    %1044 = vmatpush1.bf16.msra.mxu0 0
    %1045 = vmatprep.subr.bf16.mxu0 0
    %1046 = vmatpush1.bf16.msra.mxu0 %v1028
    %1047 = vmatprep.subr.bf16.mxu0 0
    %1048 = vmatpush1.bf16.msra.mxu0 %v1027
    %1049 = vmatprep.subr.bf16.mxu0 0
    %1050 = vmatpush1.bf16.msra.mxu0 %v1026
    %1051 = vmatprep.subr.bf16.mxu0 0
    %1052 = vmatpush1.bf16.msra.mxu0 %v1025
    %1053 = vmatprep.subr.bf16.mxu0 0
    %1054 = vmatpush2.bf16.msra.mxu0 0
    %1055 = vmatprep.subr.bf16.mxu0 0
    %1056 = vmatpush2.bf16.msra.mxu0 0
    %1057 = vmatprep.subr.bf16.mxu0 0
    %1058 = vmatpush2.bf16.msra.mxu0 0
    %1059 = vmatprep.subr.bf16.mxu0 0
    %1060 = vmatpush2.bf16.msra.mxu0 0
    %1061 = vmatprep.subr.bf16.mxu0 0
    %1062 = vmatpush2.bf16.msra.mxu0 0
    %1063 = vmatprep.subr.bf16.mxu0 0
    %1064 = vmatpush2.bf16.msra.mxu0 0
    %1065 = vmatprep.subr.bf16.mxu0 0
    %1066 = vmatpush2.bf16.msra.mxu0 0
    %1067 = vmatprep.subr.bf16.mxu0 0
    %1068 = vmatpush2.bf16.msra.mxu0 0
    %1069 = vmatprep.mubr.bf16.mxu0 0
    %1070 = vmatmul.mubr.bf16.gmra.mxu0 %v1035
    %v1071 = vpop.f32.mrf.mxu0
    %v1072 = vadd.f32 %v1007, %v1071
    %v1073 = vpop.f32.mrf.mxu0
    %v1074 = vpop.f32.mrf.mxu0
    %v1075 = vadd.f32 %v1007, %v1074
    %v1076 = vpop.f32.mrf.mxu0
    %1077 = vdwg.mxu0
    %1078 = vst [vmem:[#allocation7] sm:$0xff] %v1072
    %1079 = vst [vmem:[#allocation7 + $0x8] sm:$0xff] %v1075
    // Predicated region
    $region46: #{tpu_custom_call.1} parent=1 // pred_check
      _
    $region47: #{tpu_custom_call.1} parent=1 // pred_check_branch
      %1081 = sbr.rel (0) target = $region49
    $region48: #{tpu_custom_call.1} parent=1 // pred_region
      %s1083 = ssub.s32 256, 256
      %1084 = vsyncadd [#allocation4], %s1083
      %s1085 = sshll.u32 [#allocation7], 4
      %s1086 = int_to_ptr.vmem [resolvable:$true] %s1085
      %1091 = dma.vmem_to_hbm [thread:$0]  %s1086, 256, %s9, [#allocation4], 128, 128, 8
    $region49: #{tpu_custom_call.1} parent=1 // pred_fallthru
      _
    // Predicated region
    $region50: #{tpu_custom_call.1} parent=1 // pred_check
      _
    $region51: #{tpu_custom_call.1} parent=1 // pred_check_branch
      %1093 = sbr.rel (0) target = $region53
    $region52: #{tpu_custom_call.1} parent=1 // pred_region
      %1094 = dma.done [#allocation4], 256
    $region53: #{tpu_custom_call.1} parent=1 // pred_fallthru
      _
    %1095 = vsyncpa [#allocation3], 1
    %1096 = vsyncpa [#allocation6], 1
    %1097 = vsyncpa [#allocation4], 1

</llo_original>
